<compile_context>
chip_gen: v7x
topology: tpu7x:2x2x1
jax: 0.10.0
libtpu: 0.0.40
codegen_flags: <defaults>
</compile_context>

<pallas_src>
import functools

import jax
import jax.numpy as jnp
from jax.experimental import pallas as pl
from jax.experimental.pallas import tpu as pltpu

_MIB = 1024 * 1024


def _round_up(x, m):
    return ((x + m - 1) // m) * m


def _cdiv(a, b):
    return -(-a // b)


def _vmem_capacity_bytes():
    """Physical VMEM of the local chip (v5e/v6e: 128 MiB, v7x: 64 MiB)."""
    try:
        cap = getattr(pltpu.get_tpu_info(), "vmem_capacity_bytes", None)
        if cap:
            return int(cap)
    except Exception:
        pass
    return 64 * _MIB  # conservative fallback (v7x-sized)


def _conv_adapter_kernel(x_ref, w_ref, b_ref, o_ref, acc_ref, *,
                         tk, n_k, k_valid, ragged_k, mxu_dtype):
    """One (M-tile, K-tile) grid step of  out = X @ W + b.

    x_ref:   (TM, TK)    activation tile (native layout, K ordered (h, w, ci))
    w_ref:   (TK, Cout)  weight tile (K-major -> the dot is fully canonical)
    b_ref:   (1, Cout)   bias row (f32)
    o_ref:   (TM, Cout)  output tile (revisited across K)
    acc_ref: (TM, Cout)  f32 accumulator scratch (VMEM), resident across K
    """
    kidx = pl.program_id(1)

    @pl.when(kidx == 0)
    def _init():
        # Fold the bias into the accumulator init (added exactly once per row).
        acc_ref[...] = jnp.broadcast_to(b_ref[...], acc_ref.shape)

    x = x_ref[...]
    if ragged_k:
        # K does not divide into the chosen tile: the last K block's pad region
        # holds stale VMEM (possibly NaN/Inf) which would poison the MXU
        # accumulate.  Zero the tail columns (the weight's K pad is zeroed in
        # the wrapper, so the pad region contributes exactly 0).
        col = jax.lax.broadcasted_iota(jnp.int32, x.shape, 1)
        x = jnp.where(col + kidx * tk < k_valid, x, jnp.zeros_like(x))

    # Canonical (tm, tk) @ (tk, Cout): no transposed contraction on EITHER
    # operand, so Mosaic never relayouts the large activation tile.  bf16 MXU
    # feed (full rate, half the vreg/VMEM footprint) with f32 accumulation.
    acc_ref[...] += jnp.dot(x.astype(mxu_dtype), w_ref[...],
                            preferred_element_type=jnp.float32)

    @pl.when(kidx == n_k - 1)
    def _finalize():
        o_ref[...] = acc_ref[...].astype(o_ref.dtype)


def _pick_tk(K, cap):
    """K tile.  Prefer a multiple-of-128 divisor of K (no K tail); fall back to
    a large non-divisor tile with in-kernel tail masking for awkward K."""
    if K <= cap:
        return K, False                       # single K step, never ragged
    if K % 128 == 0:
        t = (cap // 128) * 128
        while t >= 512:                       # don't accept tiny divisors
            if K % t == 0:
                return t, False
            t -= 128
    # Awkward K: big non-divisor tile; the kernel masks the K tail.
    return (cap // 128) * 128, True


def _tile_vmem_bytes(tm, tk, cout, x_item, w_item, out_item):
    """Conservative per-pipeline VMEM estimate: double buffers, the bf16
    staging copy of the X tile, lane padding of Cout-minor tiles, and the f32
    accumulator (+ matmul result temp)."""
    cout_l = _round_up(cout, 128)
    return (2 * tm * tk * x_item          # X tile, double-buffered
            + tm * tk * 2                 # bf16 staging of X (if astype materializes)
            + 2 * tk * cout_l * w_item    # weight tile, double-buffered (lane pad)
            + 2 * tm * cout_l * out_item  # output tile, double-buffered (lane pad)
            + 2 * tm * cout_l * 4)        # f32 accumulator + result temp


def _pick_tm(M, tk, cout, x_item, w_item, out_item, budget, tm_cap):
    """M tile: full M when tiny; otherwise a multiple of 128 chosen so the
    "parallel" M axis has >= 2 steps (keeps both v7x TensorCores busy) and the
    working set fits the VMEM budget."""
    if M <= 128:
        return M                              # full extent is always legal
    tm = min(tm_cap, _round_up(_cdiv(M, 2), 128))   # guarantees >= 2 M steps
    while tm > 128 and _tile_vmem_bytes(tm, tk, cout, x_item, w_item,
                                        out_item) > budget:
        tm -= 128
    return max(tm, 128)


def conv_adapter(x, weight, bias, *, mxu_dtype=jnp.bfloat16):
    """ConvAdapter forward pass.

    Args:
      x:      (B, T, H, W, C_in) activations.  f32 or bf16 -- bf16 producer
              output is fed to the MXU as-is (halves the dominant HBM read);
              f32 is cast to `mxu_dtype` inside the kernel.
      weight: (C_out, C_in, 1, H, W)  Conv3d weight with kernel (1, H, W).
      bias:   (C_out,)
    Returns:
      (B, C_out, T) -- matches torch: permute -> conv3d -> squeeze(dim=(3, 4)).

    Precision note: the MXU is fed `mxu_dtype` (default bf16) with f32
    accumulation and f32 bias; pass mxu_dtype=jnp.float32 for strict f32.
    """
    B, T, H, W, Cin = x.shape
    Cout, Cin_w, kt, kh, kw = weight.shape
    assert (Cin_w, kt, kh, kw) == (Cin, 1, H, W), (weight.shape, x.shape)

    M = B * T
    K = H * W * Cin

    # Free reshape of the big activation: K ordered (h, w, ci) is x's native
    # minor-dim order -> no relayout / extra HBM pass over X.
    x_mat = x.reshape(M, K)
    # Tiny weight: reorder to (K=(h,w,ci), Cout) so the in-kernel dot is fully
    # canonical, and pre-cast to the MXU feed dtype (negligible HBM traffic).
    w_kc = jnp.transpose(weight[:, :, 0, :, :], (2, 3, 1, 0)).reshape(K, Cout)
    w_kc = w_kc.astype(mxu_dtype)
    b_row = bias.reshape(1, Cout).astype(jnp.float32)

    # Generation-aware VMEM budgeting (v5e/v6e: 128 MiB physical -> big tiles;
    # v7x: 64 MiB -> conservative), per the measured tile-size/roofline curve.
    if _vmem_capacity_bytes() >= 96 * _MIB:
        vmem_limit, tile_budget, tk_cap, tm_cap = 96 * _MIB, 56 * _MIB, 4096, 1024
    else:
        vmem_limit, tile_budget, tk_cap, tm_cap = 44 * _MIB, 28 * _MIB, 2048, 512

    tk, ragged_k = _pick_tk(K, tk_cap)
    n_k = _cdiv(K, tk)
    k_pad = n_k * tk
    if ragged_k:
        # Zero-pad the tiny weight's K so (a) its blocks never carry stale VMEM
        # and (b) the pad region contributes exactly 0 to the accumulator.
        w_kc = jnp.pad(w_kc, ((0, k_pad - K), (0, 0)))
    else:
        assert K % tk == 0, (K, tk)  # reduction correctness relies on this

    x_item = jnp.dtype(x.dtype).itemsize
    w_item = jnp.dtype(w_kc.dtype).itemsize
    tm = _pick_tm(M, tk, Cout, x_item, w_item, x_item, tile_budget, tm_cap)
    grid = (_cdiv(M, tm), n_k)

    kernel = functools.partial(
        _conv_adapter_kernel,
        tk=tk, n_k=n_k, k_valid=K, ragged_k=ragged_k, mxu_dtype=mxu_dtype)

    out_mat = pl.pallas_call(
        kernel,
        out_shape=jax.ShapeDtypeStruct((M, Cout), x.dtype),
        grid_spec=pltpu.PrefetchScalarGridSpec(
            num_scalar_prefetch=0,
            grid=grid,
            in_specs=[
                # Big streaming operand: native-layout activation tiles.
                # TODO(synk): sweep pipeline_mode=pl.Buffered(3) here on v7x.
                pl.BlockSpec((tm, tk), lambda i, k: (i, k)),
                # Tiny weight tile (contiguous in HBM); re-fetched per K step
                # costs <= ~1.6% of the X traffic.
                pl.BlockSpec((tk, Cout), lambda i, k: (k, 0)),
                # Bias row (constant block index -> fetched once).
                pl.BlockSpec((1, Cout), lambda i, k: (0, 0)),
            ],
            # Output block revisited across K (accumulator pattern); its
            # (tm, Cout) writeback is one contiguous HBM chunk and <1% of the
            # kernel's HBM traffic.
            out_specs=pl.BlockSpec((tm, Cout), lambda i, k: (i, 0)),
            scratch_shapes=[pltpu.VMEM((tm, Cout), jnp.float32)],
        ),
        compiler_params=pltpu.CompilerParams(
            # M axis "parallel" -> sharded across v7x's two TensorCores
            # (_pick_tm guarantees >= 2 M steps whenever M > 128); the K axis
            # is the sequential reduction.
            dimension_semantics=("parallel", "arbitrary"),
            vmem_limit_bytes=vmem_limit,
        ),
        cost_estimate=pl.CostEstimate(
            flops=2 * M * K * Cout,
            transcendentals=0,
            bytes_accessed=(M * K * x_item + k_pad * Cout * w_item
                            + Cout * 4 + M * Cout * x_item),
        ),
    )(x_mat, w_kc, b_row)

    # Tiny relayout of the (M, Cout) result to the module's (B, Cout, T) output
    # (touches only Cout/K of the activation bytes; left to XLA).
    return jnp.transpose(out_mat.reshape(B, T, Cout), (0, 2, 1))


def _ref_bf16_quantized(x, weight, bias):
    """Reference with the same bf16 quantization of the MXU inputs."""
    xq = x.astype(jnp.bfloat16).astype(jnp.float32)
    wq = weight[:, :, 0, :, :].astype(jnp.bfloat16).astype(jnp.float32)
    return (jnp.einsum("bthwc,ochw->bot", xq, wq,
                       precision=jax.lax.Precision.HIGHEST)
            + bias[None, :, None])


if __name__ == "__main__":
    # Small shapes consistent with the module:
    #   in_channels=4, out_channels=8, n_patches_height=4, n_patches_width=4
    #   x: (B=2, T=8, H=4, W=4, C_in=4)
    B, T, Hp, Wp, Cin, Cout = 2, 8, 4, 4, 4, 8

    key = jax.random.PRNGKey(0)
    kx, kw, kb, kx2, kw2, kb2, kx3, kw3, kb3 = jax.random.split(key, 9)

    x = jax.random.normal(kx, (B, T, Hp, Wp, Cin), dtype=jnp.float32)
    weight = jax.random.normal(kw, (Cout, Cin, 1, Hp, Wp), dtype=jnp.float32) * 0.05
    bias = jax.random.normal(kb, (Cout,), dtype=jnp.float32) * 0.05

    fwd = jax.jit(conv_adapter)
    out = fwd(x, weight, bias)
    jax.block_until_ready(out)
    assert out.shape == (B, Cout, T), out.shape

    # Tight check: same math with the same bf16 quantization of the MXU inputs.
    ref_q = _ref_bf16_quantized(x, weight, bias)
    assert jnp.allclose(out, ref_q, atol=1e-3, rtol=1e-3), (
        float(jnp.max(jnp.abs(out - ref_q))))

    # Loose check: full-f32 reference (bounds the bf16-MXU-feed error).
    ref_f32 = (
        jnp.einsum("bthwc,ochw->bot", x, weight[:, :, 0, :, :],
                   precision=jax.lax.Precision.HIGHEST)
        + bias[None, :, None]
    )
    assert jnp.allclose(out, ref_f32, atol=5e-2, rtol=5e-2), (
        float(jnp.max(jnp.abs(out - ref_f32))))

    # bf16-producer path (review item 2): bf16 activations consumed as-is.
    out_bf16 = fwd(x.astype(jnp.bfloat16), weight, bias)
    jax.block_until_ready(out_bf16)
    assert out_bf16.dtype == jnp.bfloat16 and out_bf16.shape == (B, Cout, T)
    assert jnp.allclose(out_bf16.astype(jnp.float32), ref_q,
                        atol=3e-2, rtol=3e-2), (
        float(jnp.max(jnp.abs(out_bf16.astype(jnp.float32) - ref_q))))

    # Multi-K-step path (K has a nice multiple-of-128 divisor -> no tail mask).
    H2, W2, C2 = 8, 8, 72          # K = 4608
    x2 = jax.random.normal(kx2, (B, T, H2, W2, C2), dtype=jnp.float32)
    w2 = jax.random.normal(kw2, (Cout, C2, 1, H2, W2), dtype=jnp.float32) * 0.05
    b2 = jax.random.normal(kb2, (Cout,), dtype=jnp.float32) * 0.05
    out2 = fwd(x2, w2, b2)
    jax.block_until_ready(out2)
    ref2 = _ref_bf16_quantized(x2, w2, b2)
    assert jnp.allclose(out2, ref2, atol=1e-2, rtol=1e-2), (
        float(jnp.max(jnp.abs(out2 - ref2))))

    # Ragged-K path (K not a multiple of 128 and larger than the tile cap).
    H3, W3, C3 = 8, 8, 65          # K = 4160
    x3 = jax.random.normal(kx3, (B, T, H3, W3, C3), dtype=jnp.float32)
    w3 = jax.random.normal(kw3, (Cout, C3, 1, H3, W3), dtype=jnp.float32) * 0.05
    b3 = jax.random.normal(kb3, (Cout,), dtype=jnp.float32) * 0.05
    out3 = fwd(x3, w3, b3)
    jax.block_until_ready(out3)
    ref3 = _ref_bf16_quantized(x3, w3, b3)
    assert jnp.allclose(out3, ref3, atol=1e-2, rtol=1e-2), (
        float(jnp.max(jnp.abs(out3 - ref3))))

    print("KERNEL_OK")
</pallas_src>

<mosaic_0001>
module attributes {stable_mosaic.version = 11 : i64} {
  func.func @_conv_adapter_kernel(%arg0: i32, %arg1: i32, %arg2: memref<16x64xf32, #tpu.memory_space<vmem>>, %arg3: memref<64x8xbf16, #tpu.memory_space<vmem>>, %arg4: memref<1x8xf32, #tpu.memory_space<vmem>>, %arg5: memref<16x8xf32, #tpu.memory_space<vmem>>, %arg6: memref<16x8xf32, #tpu.memory_space<vmem>>) attributes {dimension_semantics = [#tpu.dimension_semantics<parallel>, #tpu.dimension_semantics<arbitrary>], iteration_bounds = array<i64: 1, 1>, scalar_prefetch = 0 : i64, scratch_operands = 1 : i64, tpu.core_type = #tpu.core_type<tc>, window_params = [{transform_indices = @transform_0, window_bounds = array<i64: 16, 64>}, {transform_indices = @transform_1, window_bounds = array<i64: 64, 8>}, {pipeline_mode = #tpu.pipeline_mode<synchronous>, transform_indices = @transform_2, window_bounds = array<i64: 1, 8>}, {transform_indices = @transform_3, window_bounds = array<i64: 16, 8>}]} {
    %c0_i32 = arith.constant 0 : i32
    %0 = arith.cmpi eq, %arg1, %c0_i32 : i32
    %1 = arith.extui %0 : i1 to i32
    %c0_i32_0 = arith.constant 0 : i32
    %2 = arith.cmpi ne, %1, %c0_i32_0 : i32
    scf.if %2 {
      %c0_10 = arith.constant 0 : index
      %c0_11 = arith.constant 0 : index
      %13 = vector.load %arg4[%c0_10, %c0_11] : memref<1x8xf32, #tpu.memory_space<vmem>>, vector<1x8xf32>
      %14 = vector.shape_cast %13 : vector<1x8xf32> to vector<1x8xf32>
      %15 = vector.broadcast %14 : vector<1x8xf32> to vector<16x8xf32>
      %c0_12 = arith.constant 0 : index
      %c0_13 = arith.constant 0 : index
      %16 = vector.load %arg6[%c0_12, %c0_13] : memref<16x8xf32, #tpu.memory_space<vmem>>, vector<16x8xf32>
      tpu.vector_store %arg6[%c0_12, %c0_13], %15 {strides = array<i32>} : memref<16x8xf32, #tpu.memory_space<vmem>>, vector<16x8xf32>,
    } else {
    }
    %c0 = arith.constant 0 : index
    %c0_1 = arith.constant 0 : index
    %3 = vector.load %arg2[%c0, %c0_1] : memref<16x64xf32, #tpu.memory_space<vmem>>, vector<16x64xf32>
    %c0_2 = arith.constant 0 : index
    %c0_3 = arith.constant 0 : index
    %4 = vector.load %arg6[%c0_2, %c0_3] : memref<16x8xf32, #tpu.memory_space<vmem>>, vector<16x8xf32>
    %5 = arith.truncf %3 : vector<16x64xf32> to vector<16x64xbf16>
    %c0_4 = arith.constant 0 : index
    %c0_5 = arith.constant 0 : index
    %6 = vector.load %arg3[%c0_4, %c0_5] : memref<64x8xbf16, #tpu.memory_space<vmem>>, vector<64x8xbf16>
    %cst = arith.constant dense<0.000000e+00> : vector<16x8xf32>
    %7 = tpu.matmul %5, %6, %cst {dimension_numbers = #tpu.dot_dimension_numbers<[1], [0], [0], [1], [0, 0, 1, 1], [], []>} : vector<16x64xbf16>, vector<64x8xbf16>, vector<16x8xf32> -> vector<16x8xf32>
    %8 = arith.addf %4, %7 : vector<16x8xf32>
    %c0_6 = arith.constant 0 : index
    %c0_7 = arith.constant 0 : index
    %9 = vector.load %arg6[%c0_6, %c0_7] : memref<16x8xf32, #tpu.memory_space<vmem>>, vector<16x8xf32>
    tpu.vector_store %arg6[%c0_6, %c0_7], %8 {strides = array<i32>} : memref<16x8xf32, #tpu.memory_space<vmem>>, vector<16x8xf32>,
    %c0_i32_8 = arith.constant 0 : i32
    %10 = arith.cmpi eq, %arg1, %c0_i32_8 : i32
    %11 = arith.extui %10 : i1 to i32
    %c0_i32_9 = arith.constant 0 : i32
    %12 = arith.cmpi ne, %11, %c0_i32_9 : i32
    scf.if %12 {
      %c0_10 = arith.constant 0 : index
      %c0_11 = arith.constant 0 : index
      %13 = vector.load %arg6[%c0_10, %c0_11] : memref<16x8xf32, #tpu.memory_space<vmem>>, vector<16x8xf32>
      %c0_12 = arith.constant 0 : index
      %c0_13 = arith.constant 0 : index
      %14 = vector.load %arg5[%c0_12, %c0_13] : memref<16x8xf32, #tpu.memory_space<vmem>>, vector<16x8xf32>
      tpu.vector_store %arg5[%c0_12, %c0_13], %13 {strides = array<i32>} : memref<16x8xf32, #tpu.memory_space<vmem>>, vector<16x8xf32>,
    } else {
    }
    return
  }
  func.func @transform_0(%arg0: i32, %arg1: i32) -> (i32, i32) {
    %c0_i32 = arith.constant 0 : i32
    return %arg0, %arg1 : i32, i32
  }
  func.func @transform_1(%arg0: i32, %arg1: i32) -> (i32, i32) {
    %c0_i32 = arith.constant 0 : i32
    %c0_i32_0 = arith.constant 0 : i32
    return %arg1, %c0_i32 : i32, i32
  }
  func.func @transform_2(%arg0: i32, %arg1: i32) -> (i32, i32) {
    %c0_i32 = arith.constant 0 : i32
    %c0_i32_0 = arith.constant 0 : i32
    %c0_i32_1 = arith.constant 0 : i32
    return %c0_i32, %c0_i32_0 : i32, i32
  }
  func.func @transform_3(%arg0: i32, %arg1: i32) -> (i32, i32) {
    %c0_i32 = arith.constant 0 : i32
    %c0_i32_0 = arith.constant 0 : i32
    return %arg0, %c0_i32 : i32, i32
  }
}

</mosaic_0001>

<llo_original>
// kernel: conv_adapter.1
$region0: #{conv_adapter.1}
  #allocation0 [shape = 'u32[]', space=smem, size = 0x4, offset = 0x4, fixed_abs, tag = 'smem constant byte address 0x4 - core index']
  #allocation1 [shape = 'u32[144,128]{1,0:T(1,128)}', space=vmem, size = 0x12000, scoped, tag = 'internal scratch']
  #allocation2 [shape = 'f32[16,8]{1,0:T(8,128)}', space=vmem, size = 0x2000, scoped, tag = 'scratch operand']
  %s0 = inlined_call_operand.vmem [shape: f32[16,64], index: 0, kind: input, shape index: {}]
  %s1 = inlined_call_operand.vmem [shape: bf16[64,8], index: 1, kind: input, shape index: {}]
  %s2 = inlined_call_operand.vmem [shape: f32[1,8], index: 2, kind: input, shape index: {}]
  %s3 = inlined_call_operand.vmem [shape: f32[16,8], index: 3, kind: output, shape index: {}]
  %s4 = sld [smem:[#allocation0]]
  $region30: #{conv_adapter.1} parent=0
    _
  %s6 = ssub.s32 1, %s4
  %s7 = scalar_select 0, %s6, %s4
  // Predicated region
  $region2: #{conv_adapter.1} parent=0 // pred_check
    _
  $region3: #{conv_adapter.1} parent=0 // pred_check_branch
    %9 = sbr.rel (0) target = $region5
  $region4: #{conv_adapter.1} parent=0 // pred_region
    _
  $region5: #{conv_adapter.1} parent=0 // pred_fallthru
    _
  // Predicated region
  $region6: #{conv_adapter.1} parent=0 // pred_check
    _
  $region7: #{conv_adapter.1} parent=0 // pred_check_branch
    %11 = sbr.rel (0) target = $region9
  $region8: #{conv_adapter.1} parent=0 // pred_region
    _
  $region9: #{conv_adapter.1} parent=0 // pred_fallthru
    _
  // Predicated region
  $region10: #{conv_adapter.1} parent=0 // pred_check
    _
  $region11: #{conv_adapter.1} parent=0 // pred_check_branch
    %13 = sbr.rel (0) target = $region13
  $region12: #{conv_adapter.1} parent=0 // pred_region
    _
  $region13: #{conv_adapter.1} parent=0 // pred_fallthru
    _
  %p15 = scmp.eq.s32.totalorder 0, 0
  // Predicated region
  $region14: #{conv_adapter.1} parent=0 // pred_check
    %p16 = pneg %p15
  $region15: #{conv_adapter.1} parent=0 // pred_check_branch
    %18 = sbr.rel (%p16) target = $region17
  $region16: #{conv_adapter.1} parent=0 // pred_region
    %v19 = vld [vmem:[%s2] sm:$0x1]
    %v21 = vlaneseq
    %v22 = vshrl.u32 %v21, 7
    %v23 = vsub.s32 0, %v22
    %v24 = vrot.slane %v19, %v23
    %vm26 = vcmask 64512
    %27 = vst.msk [vmem:[#allocation2] sm:$0xff] %vm26, %v24
    %28 = vst.msk [vmem:[#allocation2 + $0x8] sm:$0xff] %vm26, %v24
  $region17: #{conv_adapter.1} parent=0 // pred_fallthru
    _
  %v29 = vld [vmem:[%s0] sm:$0xff]
  %v30 = vld [vmem:[%s0 + $0x8] sm:$0xff]
  %v31 = vld [vmem:[#allocation2] sm:$0xff]
  %v32 = vld [vmem:[#allocation2 + $0x8] sm:$0xff]
  %v33 = vpack.c.bf16 %v30, %v29
  %v34 = vld [vmem:[%s1] sm:$0xf]
  %v35 = vld [vmem:[%s1 + $0x4] sm:$0xf]
  %v36 = vld [vmem:[%s1 + $0x8] sm:$0xf]
  %v37 = vld [vmem:[%s1 + $0xc] sm:$0xf]
  %v38 = vld [vmem:[%s1 + $0x10] sm:$0xf]
  %v39 = vld [vmem:[%s1 + $0x14] sm:$0xf]
  %v40 = vld [vmem:[%s1 + $0x18] sm:$0xf]
  %v41 = vld [vmem:[%s1 + $0x1c] sm:$0xf]
  %v50 = vunpack.c.l.b16 %v34
  %v51 = vunpack.c.l.b16 %v35
  %v52 = vunpack.c.l.b16 %v36
  %v53 = vunpack.c.l.b16 %v37
  %v54 = vunpack.c.l.b16 %v38
  %v55 = vunpack.c.l.b16 %v39
  %v56 = vunpack.c.l.b16 %v40
  %v57 = vunpack.c.l.b16 %v41
  %v58 = vpack.c.b16 %v51, %v50
  %v59 = vpack.c.b16 %v53, %v52
  %v60 = vpack.c.b16 %v55, %v54
  %v61 = vpack.c.b16 %v57, %v56
  %vm66 = vcmask 523264
  %v68 = vsel %vm66, %v33, 0
  %70 = vmatprep.subr.bf16.mxu0 0
  %71 = vmatpush1.bf16.msra.mxu0 %v58
  %72 = vmatprep.subr.bf16.mxu0 0
  %73 = vmatpush1.bf16.msra.mxu0 %v59
  %74 = vmatprep.subr.bf16.mxu0 0
  %75 = vmatpush1.bf16.msra.mxu0 %v60
  %76 = vmatprep.subr.bf16.mxu0 0
  %77 = vmatpush1.bf16.msra.mxu0 %v61
  %78 = vmatprep.subr.bf16.mxu0 0
  %79 = vmatpush1.bf16.msra.mxu0 0
  %80 = vmatprep.subr.bf16.mxu0 0
  %81 = vmatpush1.bf16.msra.mxu0 0
  %82 = vmatprep.subr.bf16.mxu0 0
  %83 = vmatpush1.bf16.msra.mxu0 0
  %84 = vmatprep.subr.bf16.mxu0 0
  %85 = vmatpush1.bf16.msra.mxu0 0
  %86 = vmatprep.subr.bf16.mxu0 0
  %87 = vmatpush1.bf16.msra.mxu0 0
  %88 = vmatprep.subr.bf16.mxu0 0
  %89 = vmatpush1.bf16.msra.mxu0 0
  %90 = vmatprep.subr.bf16.mxu0 0
  %91 = vmatpush1.bf16.msra.mxu0 0
  %92 = vmatprep.subr.bf16.mxu0 0
  %93 = vmatpush1.bf16.msra.mxu0 0
  %94 = vmatprep.subr.bf16.mxu0 0
  %95 = vmatpush1.bf16.msra.mxu0 0
  %96 = vmatprep.subr.bf16.mxu0 0
  %97 = vmatpush1.bf16.msra.mxu0 0
  %98 = vmatprep.subr.bf16.mxu0 0
  %99 = vmatpush1.bf16.msra.mxu0 0
  %100 = vmatprep.subr.bf16.mxu0 0
  %101 = vmatpush1.bf16.msra.mxu0 0
  %102 = vmatprep.mubr.bf16.mxu0 0
  %103 = vmatmul.mubr.bf16.gmra.mrb[0].mxu0 %v68
  %v104 = vpop.f32.mrb[0].mxu0
  %v105 = vadd.f32 0.0, %v104
  %v106 = vpop.f32.mrb[0].mxu0
  %v107 = vpop.f32.mrb[0].mxu0
  %v108 = vadd.f32 0.0, %v107
  %v109 = vpop.f32.mrb[0].mxu0
  %110 = vdwg.mxu0
  %v111 = vadd.f32 %v31, %v105
  %v112 = vadd.f32 %v32, %v108
  %vm113 = vcmask 64512
  %114 = vst.msk [vmem:[#allocation2] sm:$0xff] %vm113, %v111
  %115 = vst.msk [vmem:[#allocation2 + $0x8] sm:$0xff] %vm113, %v112
  // Predicated region
  $region18: #{conv_adapter.1} parent=0 // pred_check
    %p116 = pneg %p15
  $region19: #{conv_adapter.1} parent=0 // pred_check_branch
    %118 = sbr.rel (%p116) target = $region21
  $region20: #{conv_adapter.1} parent=0 // pred_region
    %v119 = vld [vmem:[#allocation2] sm:$0xff]
    %v120 = vld [vmem:[#allocation2 + $0x8] sm:$0xff]
    %121 = vst.msk [vmem:[%s3] sm:$0xff] %vm113, %v119
    %122 = vst.msk [vmem:[%s3 + $0x8] sm:$0xff] %vm113, %v120
  $region21: #{conv_adapter.1} parent=0 // pred_fallthru
    _
  // Predicated region
  $region22: #{conv_adapter.1} parent=0 // pred_check
    _
  $region23: #{conv_adapter.1} parent=0 // pred_check_branch
    %124 = sbr.rel (0) target = $region25
  $region24: #{conv_adapter.1} parent=0 // pred_region
    _
  $region25: #{conv_adapter.1} parent=0 // pred_fallthru
    _
  // Predicated region
  $region26: #{conv_adapter.1} parent=0 // pred_check
    _
  $region27: #{conv_adapter.1} parent=0 // pred_check_branch
    %126 = sbr.rel (0) target = $region29
  $region28: #{conv_adapter.1} parent=0 // pred_region
    _
  $region29: #{conv_adapter.1} parent=0 // pred_fallthru
    _

</llo_original>
